<compile_context>
chip_gen: v5e
topology: v5e:2x2
jax: 0.10.0
libtpu: 0.0.40
codegen_flags: <defaults>
</compile_context>

<pallas_src>
import jax
import jax.numpy as jnp
from jax.experimental import pallas as pl
from jax.experimental.pallas import tpu as pltpu

LANE = 128


def _round_up(n, m):
    return ((n + m - 1) // m) * m


def _pad2(a, rows, cols):
    return jnp.pad(a, ((0, rows - a.shape[0]), (0, cols - a.shape[1])))


def _policy_kernel(scalars_ref, x_ref, w1_ref, b1_ref, w2_ref, b2_ref,
                   w3_ref, b3_ref, noise_ref, out_ref):
    """One batch tile per grid step; weights/biases resident in VMEM."""
    sigma = scalars_ref[0]
    bound = scalars_ref[1]

    # fc1 + relu : bf16 MXU inputs, f32 accumulation, f32 elementwise tail.
    x = x_ref[...].astype(jnp.bfloat16)
    h1 = jnp.dot(x, w1_ref[...], preferred_element_type=jnp.float32) + b1_ref[...]
    h1 = jnp.maximum(h1, 0.0)

    # fc2 + relu
    h2 = jnp.dot(h1.astype(jnp.bfloat16), w2_ref[...],
                 preferred_element_type=jnp.float32) + b2_ref[...]
    h2 = jnp.maximum(h2, 0.0)

    # fc3
    action = jnp.dot(h2.astype(jnp.bfloat16), w3_ref[...],
                     preferred_element_type=jnp.float32) + b3_ref[...]

    # exploration noise (pre-tanh, as in the torch module), squash + scale.
    action = action + sigma * noise_ref[...]
    out_ref[...] = jnp.tanh(action) * bound


def policy_net_forward(x, params, noise, *, sigma, action_bound, block_b=256):
    """x: (B, state_dim) f32, noise: (B, action_dim) f32 -> (B, action_dim) f32."""
    w1, b1, w2, b2, w3, b3 = params
    B, state_dim = x.shape
    hidden_dim = w1.shape[1]
    action_dim = w3.shape[1]

    # Lane-pad every feature dim to a multiple of 128.
    sp = _round_up(state_dim, LANE)
    hp = _round_up(hidden_dim, LANE)
    ap = _round_up(action_dim, LANE)

    # Batch tile: multiple of 8 sublanes, capped at block_b rows.
    tb = min(block_b, _round_up(B, 8))
    b_pad = _round_up(B, tb)
    grid = (b_pad // tb,)

    # Zero-padding is exact: padded K-columns contribute exact zeros, padded
    # hidden/action columns stay zero through relu and are sliced off below.
    x_p = _pad2(x, b_pad, sp)
    noise_p = _pad2(noise, b_pad, ap)
    w1_p = _pad2(w1, sp, hp).astype(jnp.bfloat16)
    w2_p = _pad2(w2, hp, hp).astype(jnp.bfloat16)
    w3_p = _pad2(w3, hp, ap).astype(jnp.bfloat16)
    b1_p = _pad2(b1, 1, hp)
    b2_p = _pad2(b2, 1, hp)
    b3_p = _pad2(b3, 1, ap)
    scalars = jnp.array([sigma, action_bound], jnp.float32)

    cost = pl.CostEstimate(
        flops=2 * b_pad * (sp * hp + hp * hp + hp * ap),
        transcendentals=b_pad * ap,
        bytes_accessed=(x_p.size * 4 + noise_p.size * 4 + b_pad * ap * 4
                        + (w1_p.size + w2_p.size + w3_p.size) * 2
                        + (b1_p.size + b2_p.size + b3_p.size) * 4),
    )

    out = pl.pallas_call(
        _policy_kernel,
        out_shape=jax.ShapeDtypeStruct((b_pad, ap), jnp.float32),
        grid=grid,
        in_specs=[
            pl.BlockSpec(memory_space=pltpu.MemorySpace.SMEM),  # sigma / bound
            pl.BlockSpec((tb, sp), lambda i: (i, 0)),           # x     (blocked)
            pl.BlockSpec((sp, hp), lambda i: (0, 0)),           # W1    (resident)
            pl.BlockSpec((1, hp), lambda i: (0, 0)),            # b1
            pl.BlockSpec((hp, hp), lambda i: (0, 0)),           # W2
            pl.BlockSpec((1, hp), lambda i: (0, 0)),            # b2
            pl.BlockSpec((hp, ap), lambda i: (0, 0)),           # W3
            pl.BlockSpec((1, ap), lambda i: (0, 0)),            # b3
            pl.BlockSpec((tb, ap), lambda i: (i, 0)),           # noise (blocked)
        ],
        out_specs=pl.BlockSpec((tb, ap), lambda i: (i, 0)),
        compiler_params=pltpu.CompilerParams(
            dimension_semantics=("parallel",),
            vmem_limit_bytes=32 * 1024 * 1024,
        ),
        cost_estimate=cost,
    )(scalars, x_p, w1_p, b1_p, w2_p, b2_p, w3_p, b3_p, noise_p)

    return out[:B, :action_dim]


def init_params(key, state_dim, hidden_dim, action_dim):
    """torch.nn.Linear-style init: U[-1/sqrt(fan_in), 1/sqrt(fan_in)].
    Weights stored as (in_features, out_features); biases as (1, out_features)."""
    ks = jax.random.split(key, 6)

    def linear(kw, kb, fan_in, fan_out):
        bound = 1.0 / jnp.sqrt(fan_in)
        w = jax.random.uniform(kw, (fan_in, fan_out), jnp.float32, -bound, bound)
        b = jax.random.uniform(kb, (1, fan_out), jnp.float32, -bound, bound)
        return w, b

    w1, b1 = linear(ks[0], ks[1], state_dim, hidden_dim)
    w2, b2 = linear(ks[2], ks[3], hidden_dim, hidden_dim)
    w3, b3 = linear(ks[4], ks[5], hidden_dim, action_dim)
    return (w1, b1, w2, b2, w3, b3)


def reference_forward(x, params, noise, *, sigma, action_bound):
    """Pure-JAX reference mirroring the kernel's bf16-input / f32-accum matmuls."""
    w1, b1, w2, b2, w3, b3 = params
    bf = jnp.bfloat16
    h1 = jnp.maximum(jnp.dot(x.astype(bf), w1.astype(bf),
                             preferred_element_type=jnp.float32) + b1, 0.0)
    h2 = jnp.maximum(jnp.dot(h1.astype(bf), w2.astype(bf),
                             preferred_element_type=jnp.float32) + b2, 0.0)
    a = jnp.dot(h2.astype(bf), w3.astype(bf),
                preferred_element_type=jnp.float32) + b3 + sigma * noise
    return jnp.tanh(a) * action_bound


if __name__ == "__main__":
    # Small shapes consistent with the module's forward.
    batch, state_dim, hidden_dim, action_dim = 8, 16, 32, 8
    sigma, action_bound = 0.1, 2.0

    root = jax.random.PRNGKey(0)
    k_params, k_x, k_noise = jax.random.split(root, 3)

    params = init_params(k_params, state_dim, hidden_dim, action_dim)
    x = jax.random.normal(k_x, (batch, state_dim), jnp.float32)
    # torch.randn_like(action): standard-normal noise, same shape as the action.
    noise = jax.random.normal(k_noise, (batch, action_dim), jnp.float32)

    out = policy_net_forward(x, params, noise, sigma=sigma, action_bound=action_bound)
    out = jax.block_until_ready(out)

    ref = reference_forward(x, params, noise, sigma=sigma, action_bound=action_bound)
    assert out.shape == (batch, action_dim)
    assert jnp.allclose(out, ref, atol=1e-2, rtol=1e-2), "mismatch vs JAX reference"
    assert bool(jnp.all(jnp.abs(out) <= action_bound + 1e-6)), "action_bound violated"

    print("KERNEL_OK")
</pallas_src>

<mosaic_0001>
module attributes {stable_mosaic.version = 11 : i64} {
  func.func @_policy_kernel(%arg0: i32, %arg1: memref<2xf32, #tpu.memory_space<smem>>, %arg2: memref<8x128xf32, #tpu.memory_space<vmem>>, %arg3: memref<128x128xbf16, #tpu.memory_space<vmem>>, %arg4: memref<1x128xf32, #tpu.memory_space<vmem>>, %arg5: memref<128x128xbf16, #tpu.memory_space<vmem>>, %arg6: memref<1x128xf32, #tpu.memory_space<vmem>>, %arg7: memref<128x128xbf16, #tpu.memory_space<vmem>>, %arg8: memref<1x128xf32, #tpu.memory_space<vmem>>, %arg9: memref<8x128xf32, #tpu.memory_space<vmem>>, %arg10: memref<8x128xf32, #tpu.memory_space<vmem>>) attributes {dimension_semantics = [#tpu.dimension_semantics<parallel>], iteration_bounds = array<i64: 1>, scalar_prefetch = 0 : i64, scratch_operands = 0 : i64, tpu.core_type = #tpu.core_type<tc>, window_params = [{transform_indices = @transform_0, window_bounds = array<i64: 2>}, {transform_indices = @transform_1, window_bounds = array<i64: 8, 128>}, {pipeline_mode = #tpu.pipeline_mode<synchronous>, transform_indices = @transform_2, window_bounds = array<i64: 128, 128>}, {pipeline_mode = #tpu.pipeline_mode<synchronous>, transform_indices = @transform_3, window_bounds = array<i64: 1, 128>}, {pipeline_mode = #tpu.pipeline_mode<synchronous>, transform_indices = @transform_4, window_bounds = array<i64: 128, 128>}, {pipeline_mode = #tpu.pipeline_mode<synchronous>, transform_indices = @transform_5, window_bounds = array<i64: 1, 128>}, {pipeline_mode = #tpu.pipeline_mode<synchronous>, transform_indices = @transform_6, window_bounds = array<i64: 128, 128>}, {pipeline_mode = #tpu.pipeline_mode<synchronous>, transform_indices = @transform_7, window_bounds = array<i64: 1, 128>}, {transform_indices = @transform_8, window_bounds = array<i64: 8, 128>}, {transform_indices = @transform_9, window_bounds = array<i64: 8, 128>}]} {
    %c0 = arith.constant 0 : index
    %0 = memref.load %arg1[%c0] : memref<2xf32, #tpu.memory_space<smem>>
    %c1 = arith.constant 1 : index
    %1 = memref.load %arg1[%c1] : memref<2xf32, #tpu.memory_space<smem>>
    %c0_0 = arith.constant 0 : index
    %c0_1 = arith.constant 0 : index
    %2 = vector.load %arg2[%c0_0, %c0_1] : memref<8x128xf32, #tpu.memory_space<vmem>>, vector<8x128xf32>
    %3 = arith.truncf %2 : vector<8x128xf32> to vector<8x128xbf16>
    %c0_2 = arith.constant 0 : index
    %c0_3 = arith.constant 0 : index
    %4 = vector.load %arg3[%c0_2, %c0_3] : memref<128x128xbf16, #tpu.memory_space<vmem>>, vector<128x128xbf16>
    %cst = arith.constant dense<0.000000e+00> : vector<8x128xf32>
    %5 = tpu.matmul %3, %4, %cst {dimension_numbers = #tpu.dot_dimension_numbers<[1], [0], [0], [1], [0, 0, 1, 1], [], []>} : vector<8x128xbf16>, vector<128x128xbf16>, vector<8x128xf32> -> vector<8x128xf32>
    %c0_4 = arith.constant 0 : index
    %c0_5 = arith.constant 0 : index
    %6 = vector.load %arg4[%c0_4, %c0_5] : memref<1x128xf32, #tpu.memory_space<vmem>>, vector<1x128xf32>
    %7 = vector.broadcast %6 : vector<1x128xf32> to vector<8x128xf32>
    %8 = arith.addf %5, %7 : vector<8x128xf32>
    %cst_6 = arith.constant 0.000000e+00 : f32
    %9 = vector.broadcast %cst_6 : f32 to vector<8x128xf32>
    %10 = arith.maximumf %8, %9 : vector<8x128xf32>
    %11 = arith.truncf %10 : vector<8x128xf32> to vector<8x128xbf16>
    %c0_7 = arith.constant 0 : index
    %c0_8 = arith.constant 0 : index
    %12 = vector.load %arg5[%c0_7, %c0_8] : memref<128x128xbf16, #tpu.memory_space<vmem>>, vector<128x128xbf16>
    %cst_9 = arith.constant dense<0.000000e+00> : vector<8x128xf32>
    %13 = tpu.matmul %11, %12, %cst_9 {dimension_numbers = #tpu.dot_dimension_numbers<[1], [0], [0], [1], [0, 0, 1, 1], [], []>} : vector<8x128xbf16>, vector<128x128xbf16>, vector<8x128xf32> -> vector<8x128xf32>
    %c0_10 = arith.constant 0 : index
    %c0_11 = arith.constant 0 : index
    %14 = vector.load %arg6[%c0_10, %c0_11] : memref<1x128xf32, #tpu.memory_space<vmem>>, vector<1x128xf32>
    %15 = vector.broadcast %14 : vector<1x128xf32> to vector<8x128xf32>
    %16 = arith.addf %13, %15 : vector<8x128xf32>
    %cst_12 = arith.constant 0.000000e+00 : f32
    %17 = vector.broadcast %cst_12 : f32 to vector<8x128xf32>
    %18 = arith.maximumf %16, %17 : vector<8x128xf32>
    %19 = arith.truncf %18 : vector<8x128xf32> to vector<8x128xbf16>
    %c0_13 = arith.constant 0 : index
    %c0_14 = arith.constant 0 : index
    %20 = vector.load %arg7[%c0_13, %c0_14] : memref<128x128xbf16, #tpu.memory_space<vmem>>, vector<128x128xbf16>
    %cst_15 = arith.constant dense<0.000000e+00> : vector<8x128xf32>
    %21 = tpu.matmul %19, %20, %cst_15 {dimension_numbers = #tpu.dot_dimension_numbers<[1], [0], [0], [1], [0, 0, 1, 1], [], []>} : vector<8x128xbf16>, vector<128x128xbf16>, vector<8x128xf32> -> vector<8x128xf32>
    %c0_16 = arith.constant 0 : index
    %c0_17 = arith.constant 0 : index
    %22 = vector.load %arg8[%c0_16, %c0_17] : memref<1x128xf32, #tpu.memory_space<vmem>>, vector<1x128xf32>
    %23 = vector.broadcast %22 : vector<1x128xf32> to vector<8x128xf32>
    %24 = arith.addf %21, %23 : vector<8x128xf32>
    %c0_18 = arith.constant 0 : index
    %c0_19 = arith.constant 0 : index
    %25 = vector.load %arg9[%c0_18, %c0_19] : memref<8x128xf32, #tpu.memory_space<vmem>>, vector<8x128xf32>
    %26 = vector.broadcast %0 : f32 to vector<8x128xf32>
    %27 = arith.mulf %26, %25 : vector<8x128xf32>
    %28 = arith.addf %24, %27 : vector<8x128xf32>
    %29 = math.tanh %28 : vector<8x128xf32>
    %30 = vector.broadcast %1 : f32 to vector<8x128xf32>
    %31 = arith.mulf %29, %30 : vector<8x128xf32>
    %c0_20 = arith.constant 0 : index
    %c0_21 = arith.constant 0 : index
    %32 = vector.load %arg10[%c0_20, %c0_21] : memref<8x128xf32, #tpu.memory_space<vmem>>, vector<8x128xf32>
    tpu.vector_store %arg10[%c0_20, %c0_21], %31 {strides = array<i32>} : memref<8x128xf32, #tpu.memory_space<vmem>>, vector<8x128xf32>,
    return
  }
  func.func @transform_0(%arg0: i32) -> i32 {
    %c0_i32 = arith.constant 0 : i32
    %c0_i32_0 = arith.constant 0 : i32
    return %c0_i32 : i32
  }
  func.func @transform_1(%arg0: i32) -> (i32, i32) {
    %c0_i32 = arith.constant 0 : i32
    %c0_i32_0 = arith.constant 0 : i32
    return %arg0, %c0_i32 : i32, i32
  }
  func.func @transform_2(%arg0: i32) -> (i32, i32) {
    %c0_i32 = arith.constant 0 : i32
    %c0_i32_0 = arith.constant 0 : i32
    %c0_i32_1 = arith.constant 0 : i32
    return %c0_i32, %c0_i32_0 : i32, i32
  }
  func.func @transform_3(%arg0: i32) -> (i32, i32) {
    %c0_i32 = arith.constant 0 : i32
    %c0_i32_0 = arith.constant 0 : i32
    %c0_i32_1 = arith.constant 0 : i32
    return %c0_i32, %c0_i32_0 : i32, i32
  }
  func.func @transform_4(%arg0: i32) -> (i32, i32) {
    %c0_i32 = arith.constant 0 : i32
    %c0_i32_0 = arith.constant 0 : i32
    %c0_i32_1 = arith.constant 0 : i32
    return %c0_i32, %c0_i32_0 : i32, i32
  }
  func.func @transform_5(%arg0: i32) -> (i32, i32) {
    %c0_i32 = arith.constant 0 : i32
    %c0_i32_0 = arith.constant 0 : i32
    %c0_i32_1 = arith.constant 0 : i32
    return %c0_i32, %c0_i32_0 : i32, i32
  }
  func.func @transform_6(%arg0: i32) -> (i32, i32) {
    %c0_i32 = arith.constant 0 : i32
    %c0_i32_0 = arith.constant 0 : i32
    %c0_i32_1 = arith.constant 0 : i32
    return %c0_i32, %c0_i32_0 : i32, i32
  }
  func.func @transform_7(%arg0: i32) -> (i32, i32) {
    %c0_i32 = arith.constant 0 : i32
    %c0_i32_0 = arith.constant 0 : i32
    %c0_i32_1 = arith.constant 0 : i32
    return %c0_i32, %c0_i32_0 : i32, i32
  }
  func.func @transform_8(%arg0: i32) -> (i32, i32) {
    %c0_i32 = arith.constant 0 : i32
    %c0_i32_0 = arith.constant 0 : i32
    return %arg0, %c0_i32 : i32, i32
  }
  func.func @transform_9(%arg0: i32) -> (i32, i32) {
    %c0_i32 = arith.constant 0 : i32
    %c0_i32_0 = arith.constant 0 : i32
    return %arg0, %c0_i32 : i32, i32
  }
}

</mosaic_0001>

<llo_original>
// kernel: tpu_custom_call.1
$region0: #{tpu_custom_call.1}
  #allocation0 [shape = 'u32[]', space=smem, size = 0x4, offset = 0x4, fixed_abs, tag = 'smem constant byte address 0x4 - core index']
  #allocation1 [shape = 'u32[72,128]{1,0:T(1,128)}', space=vmem, size = 0x9000, scoped, tag = 'internal scratch']
  %s0 = inlined_call_operand.hbm [shape: f32[2], index: 0, kind: input, shape index: {}]
  %s1 = inlined_call_operand.hbm [shape: f32[8,128], index: 1, kind: input, shape index: {}]
  %s2 = inlined_call_operand.hbm [shape: bf16[128,128], index: 2, kind: input, shape index: {}]
  %s3 = inlined_call_operand.vmem [shape: f32[1,128], index: 3, kind: input, shape index: {}]
  %s4 = inlined_call_operand.hbm [shape: bf16[128,128], index: 4, kind: input, shape index: {}]
  %s5 = inlined_call_operand.vmem [shape: f32[1,128], index: 5, kind: input, shape index: {}]
  %s6 = inlined_call_operand.hbm [shape: bf16[128,128], index: 6, kind: input, shape index: {}]
  %s7 = inlined_call_operand.vmem [shape: f32[1,128], index: 7, kind: input, shape index: {}]
  %s8 = inlined_call_operand.hbm [shape: f32[8,128], index: 8, kind: input, shape index: {}]
  %s9 = inlined_call_operand.hbm [shape: f32[8,128], index: 9, kind: output, shape index: {}]
  %s10 = sld [smem:[#allocation0]]
  $region70: #{tpu_custom_call.1} parent=0
    _
  %s12 = ssub.s32 1, %s10
  %s13 = scalar_select 0, %s12, %s10
  $region1: #{tpu_custom_call.1} parent=0
    #allocation2 [shape = 'u8[512]{0}', space=smem, size = 0x200, scoped, tag = 'input window, operand 0, single buffered']
    #allocation3 [shape = 's32[1]{0}', space=sflag, size = 0x4, scoped, tag = 'scoped memory for tpu_custom_call.1']
    #allocation4 [shape = 's32[1]{0}', space=sflag, size = 0x4, scoped, tag = 'scoped memory for tpu_custom_call.1']
    #allocation5 [shape = 's32[1]{0}', space=sflag, size = 0x4, scoped, tag = 'scoped memory for tpu_custom_call.1']
    #allocation6 [shape = 'u8[4096]{0}', space=vmem, size = 0x1000, scoped, tag = 'input window, operand 1, single buffered']
    #allocation7 [shape = 'u8[32768]{0}', space=vmem, size = 0x8000, scoped, tag = 'input window, operand 2, single buffered']
    #allocation8 [shape = 's32[1]{0}', space=sflag, size = 0x4, scoped, tag = 'scoped memory for tpu_custom_call.1']
    #allocation9 [shape = 'u8[32768]{0}', space=vmem, size = 0x8000, scoped, tag = 'input window, operand 4, single buffered']
    #allocation10 [shape = 'u8[32768]{0}', space=vmem, size = 0x8000, scoped, tag = 'input window, operand 6, single buffered']
    #allocation11 [shape = 's32[1]{0}', space=sflag, size = 0x4, scoped, tag = 'scoped memory for tpu_custom_call.1']
    #allocation12 [shape = 'u8[4096]{0}', space=vmem, size = 0x1000, scoped, tag = 'input window, operand 8, single buffered']
    #allocation13 [shape = 'u8[4096]{0}', space=vmem, size = 0x1000, scoped, tag = 'output window, operand 0, single buffered']
    %14 = vsyncpa [#allocation5], 0
    %15 = vsyncpa [#allocation3], 0
    %16 = vsyncpa [#allocation8], 0
    %17 = vsyncpa [#allocation11], 0
    %18 = vsyncpa [#allocation4], 0
    // Predicated region
    $region2: #{tpu_custom_call.1} parent=1 // pred_check
      _
    $region3: #{tpu_custom_call.1} parent=1 // pred_check_branch
      %20 = sbr.rel (0) target = $region5
    $region4: #{tpu_custom_call.1} parent=1 // pred_region
      %22 = vsyncadd [#allocation5], 0
      %s24 = sshll.u32 %s0, 4
      %s25 = int_to_ptr.hbm [resolvable:$true] %s24
      %27 = dma.hbm_to_smem %s25, 16, [#allocation2], [#allocation5]
    $region5: #{tpu_custom_call.1} parent=1 // pred_fallthru
      _
    // Predicated region
    $region6: #{tpu_custom_call.1} parent=1 // pred_check
      _
    $region7: #{tpu_custom_call.1} parent=1 // pred_check_branch
      %29 = sbr.rel (0) target = $region9
    $region8: #{tpu_custom_call.1} parent=1 // pred_region
      %31 = vsyncadd [#allocation3], 0
      %s33 = sshll.u32 %s1, 4
      %s34 = int_to_ptr.hbm [resolvable:$true] %s33
      %s35 = sshll.u32 [#allocation6], 4
      %s36 = int_to_ptr.vmem [resolvable:$true] %s35
      %38 = dma.hbm_to_vmem [thread:$0]  %s34, 128, %s36, [#allocation3]
    $region9: #{tpu_custom_call.1} parent=1 // pred_fallthru
      _
    // Predicated region
    $region10: #{tpu_custom_call.1} parent=1 // pred_check
      _
    $region11: #{tpu_custom_call.1} parent=1 // pred_check_branch
      %40 = sbr.rel (0) target = $region13
    $region12: #{tpu_custom_call.1} parent=1 // pred_region
      %42 = vsyncadd [#allocation8], 0
      %s43 = sshll.u32 %s2, 4
      %s44 = int_to_ptr.hbm [resolvable:$true] %s43
      %s45 = sshll.u32 [#allocation7], 4
      %s46 = int_to_ptr.vmem [resolvable:$true] %s45
      %51 = dma.hbm_to_vmem [thread:$0]  %s44, 1024, %s46, [#allocation8], 64, 64, 4
    $region13: #{tpu_custom_call.1} parent=1 // pred_fallthru
      _
    // Predicated region
    $region14: #{tpu_custom_call.1} parent=1 // pred_check
      _
    $region15: #{tpu_custom_call.1} parent=1 // pred_check_branch
      %53 = sbr.rel (0) target = $region17
    $region16: #{tpu_custom_call.1} parent=1 // pred_region
      _
    $region17: #{tpu_custom_call.1} parent=1 // pred_fallthru
      _
    // Predicated region
    $region18: #{tpu_custom_call.1} parent=1 // pred_check
      _
    $region19: #{tpu_custom_call.1} parent=1 // pred_check_branch
      %55 = sbr.rel (0) target = $region21
    $region20: #{tpu_custom_call.1} parent=1 // pred_region
      %57 = vsyncadd [#allocation8], 0
      %s58 = sshll.u32 %s4, 4
      %s59 = int_to_ptr.hbm [resolvable:$true] %s58
      %s60 = sshll.u32 [#allocation9], 4
      %s61 = int_to_ptr.vmem [resolvable:$true] %s60
      %66 = dma.hbm_to_vmem [thread:$0]  %s59, 1024, %s61, [#allocation8], 64, 64, 4
    $region21: #{tpu_custom_call.1} parent=1 // pred_fallthru
      _
    // Predicated region
    $region22: #{tpu_custom_call.1} parent=1 // pred_check
      _
    $region23: #{tpu_custom_call.1} parent=1 // pred_check_branch
      %68 = sbr.rel (0) target = $region25
    $region24: #{tpu_custom_call.1} parent=1 // pred_region
      _
    $region25: #{tpu_custom_call.1} parent=1 // pred_fallthru
      _
    // Predicated region
    $region26: #{tpu_custom_call.1} parent=1 // pred_check
      _
    $region27: #{tpu_custom_call.1} parent=1 // pred_check_branch
      %70 = sbr.rel (0) target = $region29
    $region28: #{tpu_custom_call.1} parent=1 // pred_region
      %72 = vsyncadd [#allocation11], 0
      %s73 = sshll.u32 %s6, 4
      %s74 = int_to_ptr.hbm [resolvable:$true] %s73
      %s75 = sshll.u32 [#allocation10], 4
      %s76 = int_to_ptr.vmem [resolvable:$true] %s75
      %81 = dma.hbm_to_vmem [thread:$0]  %s74, 1024, %s76, [#allocation11], 64, 64, 4
    $region29: #{tpu_custom_call.1} parent=1 // pred_fallthru
      _
    // Predicated region
    $region30: #{tpu_custom_call.1} parent=1 // pred_check
      _
    $region31: #{tpu_custom_call.1} parent=1 // pred_check_branch
      %83 = sbr.rel (0) target = $region33
    $region32: #{tpu_custom_call.1} parent=1 // pred_region
      _
    $region33: #{tpu_custom_call.1} parent=1 // pred_fallthru
      _
    // Predicated region
    $region34: #{tpu_custom_call.1} parent=1 // pred_check
      _
    $region35: #{tpu_custom_call.1} parent=1 // pred_check_branch
      %85 = sbr.rel (0) target = $region37
    $region36: #{tpu_custom_call.1} parent=1 // pred_region
      %87 = vsyncadd [#allocation11], 0
      %s89 = sshll.u32 %s8, 4
      %s90 = int_to_ptr.hbm [resolvable:$true] %s89
      %s91 = sshll.u32 [#allocation12], 4
      %s92 = int_to_ptr.vmem [resolvable:$true] %s91
      %94 = dma.hbm_to_vmem [thread:$0]  %s90, 128, %s92, [#allocation11]
    $region37: #{tpu_custom_call.1} parent=1 // pred_fallthru
      _
    // Predicated region
    $region38: #{tpu_custom_call.1} parent=1 // pred_check
      _
    $region39: #{tpu_custom_call.1} parent=1 // pred_check_branch
      %96 = sbr.rel (0) target = $region41
    $region40: #{tpu_custom_call.1} parent=1 // pred_region
      %98 = dma.done [#allocation5], 16
    $region41: #{tpu_custom_call.1} parent=1 // pred_fallthru
      _
    // Predicated region
    $region42: #{tpu_custom_call.1} parent=1 // pred_check
      _
    $region43: #{tpu_custom_call.1} parent=1 // pred_check_branch
      %100 = sbr.rel (0) target = $region45
    $region44: #{tpu_custom_call.1} parent=1 // pred_region
      %102 = dma.done [#allocation3], 128
    $region45: #{tpu_custom_call.1} parent=1 // pred_fallthru
      _
    // Predicated region
    $region46: #{tpu_custom_call.1} parent=1 // pred_check
      _
    $region47: #{tpu_custom_call.1} parent=1 // pred_check_branch
      %104 = sbr.rel (0) target = $region49
    $region48: #{tpu_custom_call.1} parent=1 // pred_region
      %106 = dma.done [#allocation8], 1024
    $region49: #{tpu_custom_call.1} parent=1 // pred_fallthru
      _
    // Predicated region
    $region50: #{tpu_custom_call.1} parent=1 // pred_check
      _
    $region51: #{tpu_custom_call.1} parent=1 // pred_check_branch
      %108 = sbr.rel (0) target = $region53
    $region52: #{tpu_custom_call.1} parent=1 // pred_region
      %110 = dma.done [#allocation8], 1024
    $region53: #{tpu_custom_call.1} parent=1 // pred_fallthru
      _
    // Predicated region
    $region54: #{tpu_custom_call.1} parent=1 // pred_check
      _
    $region55: #{tpu_custom_call.1} parent=1 // pred_check_branch
      %112 = sbr.rel (0) target = $region57
    $region56: #{tpu_custom_call.1} parent=1 // pred_region
      %114 = dma.done [#allocation11], 1024
    $region57: #{tpu_custom_call.1} parent=1 // pred_fallthru
      _
    // Predicated region
    $region58: #{tpu_custom_call.1} parent=1 // pred_check
      _
    $region59: #{tpu_custom_call.1} parent=1 // pred_check_branch
      %116 = sbr.rel (0) target = $region61
    $region60: #{tpu_custom_call.1} parent=1 // pred_region
      %118 = dma.done [#allocation11], 128
    $region61: #{tpu_custom_call.1} parent=1 // pred_fallthru
      _
    %119 = sfence
    %s120 = sld [smem:[#allocation2]]
    %s121 = sld [smem:[#allocation2 + $0x1]]
    %v122 = vld [vmem:[#allocation6] sm:$0xff]
    %v123 = vpack.c.bf16 %v122, %v122
    %v124 = vld [vmem:[#allocation7] sm:$0xf]
    %v125 = vld [vmem:[#allocation7 + $0x4] sm:$0xf]
    %v126 = vld [vmem:[#allocation7 + $0x8] sm:$0xf]
    %v127 = vld [vmem:[#allocation7 + $0xc] sm:$0xf]
    %v128 = vld [vmem:[#allocation7 + $0x10] sm:$0xf]
    %v129 = vld [vmem:[#allocation7 + $0x14] sm:$0xf]
    %v130 = vld [vmem:[#allocation7 + $0x18] sm:$0xf]
    %v131 = vld [vmem:[#allocation7 + $0x1c] sm:$0xf]
    %v132 = vld [vmem:[#allocation7 + $0x20] sm:$0xf]
    %v133 = vld [vmem:[#allocation7 + $0x24] sm:$0xf]
    %v134 = vld [vmem:[#allocation7 + $0x28] sm:$0xf]
    %v135 = vld [vmem:[#allocation7 + $0x2c] sm:$0xf]
    %v136 = vld [vmem:[#allocation7 + $0x30] sm:$0xf]
    %v137 = vld [vmem:[#allocation7 + $0x34] sm:$0xf]
    %v138 = vld [vmem:[#allocation7 + $0x38] sm:$0xf]
    %v139 = vld [vmem:[#allocation7 + $0x3c] sm:$0xf]
    %v140 = vld [vmem:[%s3] sm:$0x1]
    %v142 = vperm.slane %v140, 0
    %v160 = vunpack.c.l.b16 %v124
    %v161 = vunpack.c.l.b16 %v125
    %v162 = vunpack.c.l.b16 %v126
    %v163 = vunpack.c.l.b16 %v127
    %v164 = vunpack.c.l.b16 %v128
    %v165 = vunpack.c.l.b16 %v129
    %v166 = vunpack.c.l.b16 %v130
    %v167 = vunpack.c.l.b16 %v131
    %v168 = vunpack.c.l.b16 %v132
    %v169 = vunpack.c.l.b16 %v133
    %v170 = vunpack.c.l.b16 %v134
    %v171 = vunpack.c.l.b16 %v135
    %v172 = vunpack.c.l.b16 %v136
    %v173 = vunpack.c.l.b16 %v137
    %v174 = vunpack.c.l.b16 %v138
    %v175 = vunpack.c.l.b16 %v139
    %v176 = vpack.c.b16 %v161, %v160
    %v177 = vpack.c.b16 %v163, %v162
    %v178 = vpack.c.b16 %v165, %v164
    %v179 = vpack.c.b16 %v167, %v166
    %v180 = vpack.c.b16 %v169, %v168
    %v181 = vpack.c.b16 %v171, %v170
    %v182 = vpack.c.b16 %v173, %v172
    %v183 = vpack.c.b16 %v175, %v174
    %192 = vmatpush.bf16.msra.mxu0 %v183
    %193 = vmatpush.bf16.msra.mxu0 %v182
    %194 = vmatpush.bf16.msra.mxu0 %v181
    %195 = vmatpush.bf16.msra.mxu0 %v180
    %196 = vmatpush.bf16.msra.mxu0 %v179
    %197 = vmatpush.bf16.msra.mxu0 %v178
    %198 = vmatpush.bf16.msra.mxu0 %v177
    %199 = vmatpush.bf16.msra.mxu0 %v176
    %200 = vmatmul.bf16.gmra.mxu0 %v123
    %v201 = vpop.f32.mrf.mxu0
    %v202 = vadd.f32 %v142, %v201
    %v203 = vpop.f32.mrf.mxu0
    %204 = vdwg.mxu0
    %v205 = vmax.f32 %v202, 0.0
    %v206 = vpack.c.bf16 %v205, %v205
    %v207 = vld [vmem:[#allocation9] sm:$0xf]
    %v208 = vld [vmem:[#allocation9 + $0x4] sm:$0xf]
    %v209 = vld [vmem:[#allocation9 + $0x8] sm:$0xf]
    %v210 = vld [vmem:[#allocation9 + $0xc] sm:$0xf]
    %v211 = vld [vmem:[#allocation9 + $0x10] sm:$0xf]
    %v212 = vld [vmem:[#allocation9 + $0x14] sm:$0xf]
    %v213 = vld [vmem:[#allocation9 + $0x18] sm:$0xf]
    %v214 = vld [vmem:[#allocation9 + $0x1c] sm:$0xf]
    %v215 = vld [vmem:[#allocation9 + $0x20] sm:$0xf]
    %v216 = vld [vmem:[#allocation9 + $0x24] sm:$0xf]
    %v217 = vld [vmem:[#allocation9 + $0x28] sm:$0xf]
    %v218 = vld [vmem:[#allocation9 + $0x2c] sm:$0xf]
    %v219 = vld [vmem:[#allocation9 + $0x30] sm:$0xf]
    %v220 = vld [vmem:[#allocation9 + $0x34] sm:$0xf]
    %v221 = vld [vmem:[#allocation9 + $0x38] sm:$0xf]
    %v222 = vld [vmem:[#allocation9 + $0x3c] sm:$0xf]
    %v223 = vld [vmem:[%s5] sm:$0x1]
    %v225 = vperm.slane %v223, 0
    %v243 = vunpack.c.l.b16 %v207
    %v244 = vunpack.c.l.b16 %v208
    %v245 = vunpack.c.l.b16 %v209
    %v246 = vunpack.c.l.b16 %v210
    %v247 = vunpack.c.l.b16 %v211
    %v248 = vunpack.c.l.b16 %v212
    %v249 = vunpack.c.l.b16 %v213
    %v250 = vunpack.c.l.b16 %v214
    %v251 = vunpack.c.l.b16 %v215
    %v252 = vunpack.c.l.b16 %v216
    %v253 = vunpack.c.l.b16 %v217
    %v254 = vunpack.c.l.b16 %v218
    %v255 = vunpack.c.l.b16 %v219
    %v256 = vunpack.c.l.b16 %v220
    %v257 = vunpack.c.l.b16 %v221
    %v258 = vunpack.c.l.b16 %v222
    %v259 = vpack.c.b16 %v244, %v243
    %v260 = vpack.c.b16 %v246, %v245
    %v261 = vpack.c.b16 %v248, %v247
    %v262 = vpack.c.b16 %v250, %v249
    %v263 = vpack.c.b16 %v252, %v251
    %v264 = vpack.c.b16 %v254, %v253
    %v265 = vpack.c.b16 %v256, %v255
    %v266 = vpack.c.b16 %v258, %v257
    %275 = vmatpush.bf16.msra.mxu0 %v266
    %276 = vmatpush.bf16.msra.mxu0 %v265
    %277 = vmatpush.bf16.msra.mxu0 %v264
    %278 = vmatpush.bf16.msra.mxu0 %v263
    %279 = vmatpush.bf16.msra.mxu0 %v262
    %280 = vmatpush.bf16.msra.mxu0 %v261
    %281 = vmatpush.bf16.msra.mxu0 %v260
    %282 = vmatpush.bf16.msra.mxu0 %v259
    %283 = vmatmul.bf16.gmra.mxu0 %v206
    %v284 = vpop.f32.mrf.mxu0
    %v285 = vadd.f32 %v225, %v284
    %v286 = vpop.f32.mrf.mxu0
    %287 = vdwg.mxu0
    %v288 = vmax.f32 %v285, 0.0
    %v289 = vpack.c.bf16 %v288, %v288
    %v290 = vld [vmem:[#allocation10] sm:$0xf]
    %v291 = vld [vmem:[#allocation10 + $0x4] sm:$0xf]
    %v292 = vld [vmem:[#allocation10 + $0x8] sm:$0xf]
    %v293 = vld [vmem:[#allocation10 + $0xc] sm:$0xf]
    %v294 = vld [vmem:[#allocation10 + $0x10] sm:$0xf]
    %v295 = vld [vmem:[#allocation10 + $0x14] sm:$0xf]
    %v296 = vld [vmem:[#allocation10 + $0x18] sm:$0xf]
    %v297 = vld [vmem:[#allocation10 + $0x1c] sm:$0xf]
    %v298 = vld [vmem:[#allocation10 + $0x20] sm:$0xf]
    %v299 = vld [vmem:[#allocation10 + $0x24] sm:$0xf]
    %v300 = vld [vmem:[#allocation10 + $0x28] sm:$0xf]
    %v301 = vld [vmem:[#allocation10 + $0x2c] sm:$0xf]
    %v302 = vld [vmem:[#allocation10 + $0x30] sm:$0xf]
    %v303 = vld [vmem:[#allocation10 + $0x34] sm:$0xf]
    %v304 = vld [vmem:[#allocation10 + $0x38] sm:$0xf]
    %v305 = vld [vmem:[#allocation10 + $0x3c] sm:$0xf]
    %v306 = vld [vmem:[%s7] sm:$0x1]
    %v308 = vperm.slane %v306, 0
    %v326 = vunpack.c.l.b16 %v290
    %v327 = vunpack.c.l.b16 %v291
    %v328 = vunpack.c.l.b16 %v292
    %v329 = vunpack.c.l.b16 %v293
    %v330 = vunpack.c.l.b16 %v294
    %v331 = vunpack.c.l.b16 %v295
    %v332 = vunpack.c.l.b16 %v296
    %v333 = vunpack.c.l.b16 %v297
    %v334 = vunpack.c.l.b16 %v298
    %v335 = vunpack.c.l.b16 %v299
    %v336 = vunpack.c.l.b16 %v300
    %v337 = vunpack.c.l.b16 %v301
    %v338 = vunpack.c.l.b16 %v302
    %v339 = vunpack.c.l.b16 %v303
    %v340 = vunpack.c.l.b16 %v304
    %v341 = vunpack.c.l.b16 %v305
    %v342 = vpack.c.b16 %v327, %v326
    %v343 = vpack.c.b16 %v329, %v328
    %v344 = vpack.c.b16 %v331, %v330
    %v345 = vpack.c.b16 %v333, %v332
    %v346 = vpack.c.b16 %v335, %v334
    %v347 = vpack.c.b16 %v337, %v336
    %v348 = vpack.c.b16 %v339, %v338
    %v349 = vpack.c.b16 %v341, %v340
    %358 = vmatpush.bf16.msra.mxu0 %v349
    %359 = vmatpush.bf16.msra.mxu0 %v348
    %360 = vmatpush.bf16.msra.mxu0 %v347
    %361 = vmatpush.bf16.msra.mxu0 %v346
    %362 = vmatpush.bf16.msra.mxu0 %v345
    %363 = vmatpush.bf16.msra.mxu0 %v344
    %364 = vmatpush.bf16.msra.mxu0 %v343
    %365 = vmatpush.bf16.msra.mxu0 %v342
    %366 = vmatmul.bf16.gmra.mxu0 %v289
    %v367 = vpop.f32.mrf.mxu0
    %v368 = vadd.f32 %v308, %v367
    %v369 = vpop.f32.mrf.mxu0
    %370 = vdwg.mxu0
    %v371 = vld [vmem:[#allocation12] sm:$0xff]
    %v372 = vstv %s120
    %v373 = vmul.f32 %v372, %v371
    %v374 = vadd.f32 %v368, %v373
    %v375 = vtanh.pop %v374
    %v376 = vstv %s121
    %v377 = vmul.f32 %v375, %v376
    %378 = vst [vmem:[#allocation13] sm:$0xff] %v377
    // Predicated region
    $region62: #{tpu_custom_call.1} parent=1 // pred_check
      _
    $region63: #{tpu_custom_call.1} parent=1 // pred_check_branch
      %380 = sbr.rel (0) target = $region65
    $region64: #{tpu_custom_call.1} parent=1 // pred_region
      %382 = vsyncadd [#allocation4], 0
      %s384 = sshll.u32 [#allocation13], 4
      %s385 = int_to_ptr.vmem [resolvable:$true] %s384
      %s386 = sshll.u32 %s9, 4
      %s387 = int_to_ptr.hbm [resolvable:$true] %s386
      %389 = dma.vmem_to_hbm [thread:$0]  %s385, 128, %s387, [#allocation4]
    $region65: #{tpu_custom_call.1} parent=1 // pred_fallthru
      _
    // Predicated region
    $region66: #{tpu_custom_call.1} parent=1 // pred_check
      _
    $region67: #{tpu_custom_call.1} parent=1 // pred_check_branch
      %391 = sbr.rel (0) target = $region69
    $region68: #{tpu_custom_call.1} parent=1 // pred_region
      %393 = dma.done [#allocation4], 128
    $region69: #{tpu_custom_call.1} parent=1 // pred_fallthru
      _
    %394 = vsyncpa [#allocation3], 1
    %395 = vsyncpa [#allocation8], 1
    %396 = vsyncpa [#allocation11], 1
    %397 = vsyncpa [#allocation4], 1
    %398 = vsyncpa [#allocation5], 1

</llo_original>
